<compile_context>
chip_gen: v6e
topology: v6e:2x2x1
jax: 0.10.0
libtpu: 0.0.40
codegen_flags: <defaults>
</compile_context>

<pallas_src>
import math

import jax
import jax.numpy as jnp
from jax import lax
from jax.experimental import pallas as pl
from jax.experimental.pallas import tpu as pltpu

_INV_SQRT2 = 1.0 / math.sqrt(2.0)

# Batched over the expert dim: contract lhs dim 2 with rhs dim 1.
_DN = (((2,), (1,)), ((0,), (0,)))


def _gelu_exact_f32(x):
    # Exact GELU (PyTorch nn.GELU default): 0.5*x*(1+erf(x/sqrt(2))), in f32.
    return 0.5 * x * (1.0 + lax.erf(x * jnp.float32(_INV_SQRT2)))


def _maybe_downcast_for_second_matmul(hidden_f32, w2_dtype):
    # For f32 weights keep the f32 activation exact; only downcast when the
    # weights are lower precision (so both MXU operands match).
    if w2_dtype == jnp.float32:
        return hidden_f32
    return hidden_f32.astype(w2_dtype)


def _experts_kernel_fused(x_ref, w1_ref, w2_ref, o_ref):
    """Single hidden tile: fully fused, no accumulator scratch needed."""
    x = x_ref[...]        # (BE, BN, D)
    w1 = w1_ref[...]      # (BE, D, H)
    w2 = w2_ref[...]      # (BE, H, D_out)

    hidden = lax.dot_general(x, w1, dimension_numbers=_DN,
                             preferred_element_type=jnp.float32)  # (BE, BN, H)
    hidden = _gelu_exact_f32(hidden)
    hidden = _maybe_downcast_for_second_matmul(hidden, w2_ref.dtype)

    out = lax.dot_general(hidden, w2, dimension_numbers=_DN,
                          preferred_element_type=jnp.float32)     # (BE, BN, D_out)
    o_ref[...] = out.astype(o_ref.dtype)


def _experts_kernel_acc(x_ref, w1_ref, w2_ref, o_ref, acc_ref):
    """Hidden axis tiled: accumulate partial second-matmul results over h."""
    h_idx = pl.program_id(2)

    @pl.when(h_idx == 0)
    def _init():
        acc_ref[...] = jnp.zeros_like(acc_ref)

    x = x_ref[...]        # (BE, BN, D)
    w1 = w1_ref[...]      # (BE, D, BH)
    w2 = w2_ref[...]      # (BE, BH, D_out)

    hidden = lax.dot_general(x, w1, dimension_numbers=_DN,
                             preferred_element_type=jnp.float32)  # (BE, BN, BH)
    # GELU is elementwise in the hidden dim and the D reduction is complete
    # within one step, so applying it per h-tile is exact.
    hidden = _gelu_exact_f32(hidden)
    hidden = _maybe_downcast_for_second_matmul(hidden, w2_ref.dtype)

    acc_ref[...] += lax.dot_general(hidden, w2, dimension_numbers=_DN,
                                    preferred_element_type=jnp.float32)

    @pl.when(h_idx == pl.num_programs(2) - 1)
    def _finalize():
        o_ref[...] = acc_ref[...].astype(o_ref.dtype)


def experts_forward(x, w1, w2, *, block_e=None, block_n=None, block_h=None,
                    vmem_limit_bytes=32 * 1024 * 1024):
    """x: [E, N, D], w1: [E, D, H], w2: [E, H, D_out] -> [E, N, D_out]."""
    E, N, D = x.shape
    E1, D1, H = w1.shape
    E2, H2, D_out = w2.shape
    assert (E, D) == (E1, D1) and (E, H) == (E2, H2)

    # Defaults: at toy scale everything fits in VMEM -> a single grid step.
    # At realistic sizes pick block_h / block_n so that
    #   2 * (x + w1 + w2 + out block bytes) <= vmem_limit_bytes
    # (budget roughly half as much on v7x as on v5e/v6e), keeping block_h a
    # multiple of 128 and block_n a multiple of 8 when not full-extent.
    block_e = E if block_e is None else block_e
    block_n = N if block_n is None else block_n
    block_h = H if block_h is None else block_h
    assert E % block_e == 0 and N % block_n == 0 and H % block_h == 0

    grid_e, grid_n, grid_h = E // block_e, N // block_n, H // block_h

    itemsize = jnp.dtype(x.dtype).itemsize
    cost = pl.CostEstimate(
        flops=2 * E * N * D * H + 2 * E * N * H * D_out,
        transcendentals=E * N * H,
        bytes_accessed=(x.size + w1.size + w2.size + E * N * D_out) * itemsize,
    )

    if grid_h == 1:
        # Fused path: no reduction axis in the grid, no accumulator scratch.
        return pl.pallas_call(
            _experts_kernel_fused,
            out_shape=jax.ShapeDtypeStruct((E, N, D_out), x.dtype),
            grid=(grid_e, grid_n),
            in_specs=[
                pl.BlockSpec((block_e, block_n, D), lambda e, n: (e, n, 0)),
                pl.BlockSpec((block_e, D, H), lambda e, n: (e, 0, 0)),
                pl.BlockSpec((block_e, H, D_out), lambda e, n: (e, 0, 0)),
            ],
            out_specs=pl.BlockSpec((block_e, block_n, D_out),
                                   lambda e, n: (e, n, 0)),
            compiler_params=pltpu.CompilerParams(
                dimension_semantics=("parallel", "parallel"),
                vmem_limit_bytes=vmem_limit_bytes,
            ),
            cost_estimate=cost,
        )(x, w1, w2)

    # Streaming path: hidden reduction innermost, f32 VMEM accumulator.
    return pl.pallas_call(
        _experts_kernel_acc,
        out_shape=jax.ShapeDtypeStruct((E, N, D_out), x.dtype),
        grid=(grid_e, grid_n, grid_h),
        in_specs=[
            # x tile: resident across the inner h loop (index ignores h).
            pl.BlockSpec((block_e, block_n, D), lambda e, n, h: (e, n, 0)),
            # Weight h-tiles stream through VMEM (double-buffered by Pallas).
            pl.BlockSpec((block_e, D, block_h), lambda e, n, h: (e, 0, h)),
            pl.BlockSpec((block_e, block_h, D_out), lambda e, n, h: (e, h, 0)),
        ],
        # Output block index is constant across h -> accumulator semantics.
        out_specs=pl.BlockSpec((block_e, block_n, D_out),
                               lambda e, n, h: (e, n, 0)),
        scratch_shapes=[pltpu.VMEM((block_e, block_n, D_out), jnp.float32)],
        compiler_params=pltpu.CompilerParams(
            dimension_semantics=("parallel", "parallel", "arbitrary"),
            vmem_limit_bytes=vmem_limit_bytes,
        ),
        cost_estimate=cost,
    )(x, w1, w2)


def experts_reference(x, w1, w2):
    hidden = jnp.einsum('...nd,...dh->...nh', x, w1)
    hidden = jax.nn.gelu(hidden, approximate=False)
    return jnp.einsum('...nh,...hd->...nd', hidden, w2)


if __name__ == "__main__":
    # Small shapes consistent with the module:
    #   dim=32, hidden_dim = dim*4 = 128, dim_out=32, num_experts=4, n=8 tokens/expert
    E, N, D, H, D_OUT = 4, 8, 32, 128, 32

    key = jax.random.PRNGKey(0)
    kx, k1, k2 = jax.random.split(key, 3)

    x = jax.random.normal(kx, (E, N, D), dtype=jnp.float32)

    # Deterministic init mirroring init_(w): uniform(-1/sqrt(fan_in), 1/sqrt(fan_in)).
    w1 = jax.random.uniform(k1, (E, D, H), dtype=jnp.float32,
                            minval=-1.0 / math.sqrt(D),
                            maxval=1.0 / math.sqrt(D))
    w2 = jax.random.uniform(k2, (E, H, D_OUT), dtype=jnp.float32,
                            minval=-1.0 / math.sqrt(H),
                            maxval=1.0 / math.sqrt(H))

    out = experts_forward(x, w1, w2)
    out = jax.block_until_ready(out)

    ref = experts_reference(x, w1, w2)
    assert out.shape == (E, N, D_OUT)
    assert jnp.allclose(out, ref, atol=1e-5, rtol=1e-5), "mismatch vs reference"

    # Also exercise the hidden-streaming (accumulator) path for coverage.
    out_stream = jax.block_until_ready(experts_forward(x, w1, w2, block_h=H // 2))
    assert jnp.allclose(out_stream, ref, atol=1e-5, rtol=1e-5), "stream path mismatch"

    print("KERNEL_OK")
</pallas_src>

<mosaic_0001>
module attributes {stable_mosaic.version = 11 : i64} {
  func.func @_experts_kernel_fused(%arg0: i32, %arg1: i32, %arg2: memref<4x8x32xf32, #tpu.memory_space<vmem>>, %arg3: memref<4x32x128xf32, #tpu.memory_space<vmem>>, %arg4: memref<4x128x32xf32, #tpu.memory_space<vmem>>, %arg5: memref<4x8x32xf32, #tpu.memory_space<vmem>>) attributes {dimension_semantics = [#tpu.dimension_semantics<parallel>, #tpu.dimension_semantics<parallel>], iteration_bounds = array<i64: 1, 1>, scalar_prefetch = 0 : i64, scratch_operands = 0 : i64, tpu.core_type = #tpu.core_type<tc>, window_params = [{transform_indices = @transform_0, window_bounds = array<i64: 4, 8, 32>}, {transform_indices = @transform_1, window_bounds = array<i64: 4, 32, 128>}, {transform_indices = @transform_2, window_bounds = array<i64: 4, 128, 32>}, {transform_indices = @transform_3, window_bounds = array<i64: 4, 8, 32>}]} {
    %c0 = arith.constant 0 : index
    %c0_0 = arith.constant 0 : index
    %c0_1 = arith.constant 0 : index
    %0 = vector.load %arg2[%c0, %c0_0, %c0_1] : memref<4x8x32xf32, #tpu.memory_space<vmem>>, vector<4x8x32xf32>
    %c0_2 = arith.constant 0 : index
    %c0_3 = arith.constant 0 : index
    %c0_4 = arith.constant 0 : index
    %1 = vector.load %arg3[%c0_2, %c0_3, %c0_4] : memref<4x32x128xf32, #tpu.memory_space<vmem>>, vector<4x32x128xf32>
    %c0_5 = arith.constant 0 : index
    %c0_6 = arith.constant 0 : index
    %c0_7 = arith.constant 0 : index
    %2 = vector.load %arg4[%c0_5, %c0_6, %c0_7] : memref<4x128x32xf32, #tpu.memory_space<vmem>>, vector<4x128x32xf32>
    %cst = arith.constant dense<0.000000e+00> : vector<4x8x128xf32>
    %3 = tpu.matmul %0, %1, %cst {dimension_numbers = #tpu.dot_dimension_numbers<[2], [1], [1], [2], [0, 0, 0, 1, 1, 2], [0], [0]>} : vector<4x8x32xf32>, vector<4x32x128xf32>, vector<4x8x128xf32> -> vector<4x8x128xf32>
    %cst_8 = arith.constant 5.000000e-01 : f32
    %4 = vector.broadcast %cst_8 : f32 to vector<4x8x128xf32>
    %5 = arith.mulf %4, %3 : vector<4x8x128xf32>
    %cst_9 = arith.constant 0.707106769 : f32
    %6 = vector.broadcast %cst_9 : f32 to vector<4x8x128xf32>
    %7 = arith.mulf %3, %6 : vector<4x8x128xf32>
    %8 = math.erf %7 : vector<4x8x128xf32>
    %cst_10 = arith.constant 1.000000e+00 : f32
    %9 = vector.broadcast %cst_10 : f32 to vector<4x8x128xf32>
    %10 = arith.addf %9, %8 : vector<4x8x128xf32>
    %11 = arith.mulf %5, %10 : vector<4x8x128xf32>
    %cst_11 = arith.constant dense<0.000000e+00> : vector<4x8x32xf32>
    %12 = tpu.matmul %11, %2, %cst_11 {dimension_numbers = #tpu.dot_dimension_numbers<[2], [1], [1], [2], [0, 0, 0, 1, 1, 2], [0], [0]>} : vector<4x8x128xf32>, vector<4x128x32xf32>, vector<4x8x32xf32> -> vector<4x8x32xf32>
    %c0_12 = arith.constant 0 : index
    %c0_13 = arith.constant 0 : index
    %c0_14 = arith.constant 0 : index
    %13 = vector.load %arg5[%c0_12, %c0_13, %c0_14] : memref<4x8x32xf32, #tpu.memory_space<vmem>>, vector<4x8x32xf32>
    tpu.vector_store %arg5[%c0_12, %c0_13, %c0_14], %12 {strides = array<i32>} : memref<4x8x32xf32, #tpu.memory_space<vmem>>, vector<4x8x32xf32>,
    return
  }
  func.func @transform_0(%arg0: i32, %arg1: i32) -> (i32, i32, i32) {
    %c0_i32 = arith.constant 0 : i32
    %c0_i32_0 = arith.constant 0 : i32
    return %arg0, %arg1, %c0_i32 : i32, i32, i32
  }
  func.func @transform_1(%arg0: i32, %arg1: i32) -> (i32, i32, i32) {
    %c0_i32 = arith.constant 0 : i32
    %c0_i32_0 = arith.constant 0 : i32
    %c0_i32_1 = arith.constant 0 : i32
    return %arg0, %c0_i32, %c0_i32_0 : i32, i32, i32
  }
  func.func @transform_2(%arg0: i32, %arg1: i32) -> (i32, i32, i32) {
    %c0_i32 = arith.constant 0 : i32
    %c0_i32_0 = arith.constant 0 : i32
    %c0_i32_1 = arith.constant 0 : i32
    return %arg0, %c0_i32, %c0_i32_0 : i32, i32, i32
  }
  func.func @transform_3(%arg0: i32, %arg1: i32) -> (i32, i32, i32) {
    %c0_i32 = arith.constant 0 : i32
    %c0_i32_0 = arith.constant 0 : i32
    return %arg0, %arg1, %c0_i32 : i32, i32, i32
  }
}

</mosaic_0001>

<llo_original>
// kernel: tpu_custom_call.1
$region0: #{tpu_custom_call.1}
  #allocation0 [shape = 'u32[]', space=smem, size = 0x4, offset = 0x4, fixed_abs, tag = 'smem constant byte address 0x4 - core index']
  #allocation1 [shape = 'u32[144,128]{1,0:T(1,128)}', space=vmem, size = 0x12000, scoped, tag = 'internal scratch']
  %s0 = inlined_call_operand.vmem [shape: f32[4,8,32], index: 0, kind: input, shape index: {}]
  %s1 = inlined_call_operand.vmem [shape: f32[4,32,128], index: 1, kind: input, shape index: {}]
  %s2 = inlined_call_operand.vmem [shape: f32[4,128,32], index: 2, kind: input, shape index: {}]
  %s3 = inlined_call_operand.hbm [shape: f32[4,8,32], index: 3, kind: output, shape index: {}]
  %s4 = sld [smem:[#allocation0]]
  $region22: #{tpu_custom_call.1} parent=0
    _
  %s6 = ssub.s32 1, %s4
  %s7 = scalar_select 0, %s6, %s4
  $region1: #{tpu_custom_call.1} parent=0
    #allocation2 [shape = 'u8[16384]{0}', space=vmem, size = 0x4000, scoped, tag = 'output window, operand 0, single buffered']
    #allocation3 [shape = 's32[1]{0}', space=sflag, size = 0x4, scoped, tag = 'scoped memory for tpu_custom_call.1']
    %8 = vsyncpa [#allocation3], 0
    // Predicated region
    $region2: #{tpu_custom_call.1} parent=1 // pred_check
      _
    $region3: #{tpu_custom_call.1} parent=1 // pred_check_branch
      %10 = sbr.rel (0) target = $region5
    $region4: #{tpu_custom_call.1} parent=1 // pred_region
      _
    $region5: #{tpu_custom_call.1} parent=1 // pred_fallthru
      _
    // Predicated region
    $region6: #{tpu_custom_call.1} parent=1 // pred_check
      _
    $region7: #{tpu_custom_call.1} parent=1 // pred_check_branch
      %12 = sbr.rel (0) target = $region9
    $region8: #{tpu_custom_call.1} parent=1 // pred_region
      _
    $region9: #{tpu_custom_call.1} parent=1 // pred_fallthru
      _
    // Predicated region
    $region10: #{tpu_custom_call.1} parent=1 // pred_check
      _
    $region11: #{tpu_custom_call.1} parent=1 // pred_check_branch
      %14 = sbr.rel (0) target = $region13
    $region12: #{tpu_custom_call.1} parent=1 // pred_region
      _
    $region13: #{tpu_custom_call.1} parent=1 // pred_fallthru
      _
    %v15 = vld [vmem:[%s0] sm:$0xff]
    %v16 = vld [vmem:[%s0 + $0x8] sm:$0xff]
    %v17 = vld [vmem:[%s0 + $0x10] sm:$0xff]
    %v18 = vld [vmem:[%s0 + $0x18] sm:$0xff]
    %v19 = vld [vmem:[%s1] sm:$0xff]
    %v20 = vld [vmem:[%s1 + $0x8] sm:$0xff]
    %v21 = vld [vmem:[%s1 + $0x10] sm:$0xff]
    %v22 = vld [vmem:[%s1 + $0x18] sm:$0xff]
    %v23 = vld [vmem:[%s1 + $0x20] sm:$0xff]
    %v24 = vld [vmem:[%s1 + $0x28] sm:$0xff]
    %v25 = vld [vmem:[%s1 + $0x30] sm:$0xff]
    %v26 = vld [vmem:[%s1 + $0x38] sm:$0xff]
    %v27 = vld [vmem:[%s1 + $0x40] sm:$0xff]
    %v28 = vld [vmem:[%s1 + $0x48] sm:$0xff]
    %v29 = vld [vmem:[%s1 + $0x50] sm:$0xff]
    %v30 = vld [vmem:[%s1 + $0x58] sm:$0xff]
    %v31 = vld [vmem:[%s1 + $0x60] sm:$0xff]
    %v32 = vld [vmem:[%s1 + $0x68] sm:$0xff]
    %v33 = vld [vmem:[%s1 + $0x70] sm:$0xff]
    %v34 = vld [vmem:[%s1 + $0x78] sm:$0xff]
    %v35 = vld [vmem:[%s2] sm:$0xff]
    %v36 = vld [vmem:[%s2 + $0x8] sm:$0xff]
    %v37 = vld [vmem:[%s2 + $0x10] sm:$0xff]
    %v38 = vld [vmem:[%s2 + $0x18] sm:$0xff]
    %v39 = vld [vmem:[%s2 + $0x20] sm:$0xff]
    %v40 = vld [vmem:[%s2 + $0x28] sm:$0xff]
    %v41 = vld [vmem:[%s2 + $0x30] sm:$0xff]
    %v42 = vld [vmem:[%s2 + $0x38] sm:$0xff]
    %v43 = vld [vmem:[%s2 + $0x40] sm:$0xff]
    %v44 = vld [vmem:[%s2 + $0x48] sm:$0xff]
    %v45 = vld [vmem:[%s2 + $0x50] sm:$0xff]
    %v46 = vld [vmem:[%s2 + $0x58] sm:$0xff]
    %v47 = vld [vmem:[%s2 + $0x60] sm:$0xff]
    %v48 = vld [vmem:[%s2 + $0x68] sm:$0xff]
    %v49 = vld [vmem:[%s2 + $0x70] sm:$0xff]
    %v50 = vld [vmem:[%s2 + $0x78] sm:$0xff]
    %v51 = vld [vmem:[%s2 + $0x80] sm:$0xff]
    %v52 = vld [vmem:[%s2 + $0x88] sm:$0xff]
    %v53 = vld [vmem:[%s2 + $0x90] sm:$0xff]
    %v54 = vld [vmem:[%s2 + $0x98] sm:$0xff]
    %v55 = vld [vmem:[%s2 + $0xa0] sm:$0xff]
    %v56 = vld [vmem:[%s2 + $0xa8] sm:$0xff]
    %v57 = vld [vmem:[%s2 + $0xb0] sm:$0xff]
    %v58 = vld [vmem:[%s2 + $0xb8] sm:$0xff]
    %v59 = vld [vmem:[%s2 + $0xc0] sm:$0xff]
    %v60 = vld [vmem:[%s2 + $0xc8] sm:$0xff]
    %v61 = vld [vmem:[%s2 + $0xd0] sm:$0xff]
    %v62 = vld [vmem:[%s2 + $0xd8] sm:$0xff]
    %v63 = vld [vmem:[%s2 + $0xe0] sm:$0xff]
    %v64 = vld [vmem:[%s2 + $0xe8] sm:$0xff]
    %v65 = vld [vmem:[%s2 + $0xf0] sm:$0xff]
    %v66 = vld [vmem:[%s2 + $0xf8] sm:$0xff]
    %v67 = vld [vmem:[%s2 + $0x100] sm:$0xff]
    %v68 = vld [vmem:[%s2 + $0x108] sm:$0xff]
    %v69 = vld [vmem:[%s2 + $0x110] sm:$0xff]
    %v70 = vld [vmem:[%s2 + $0x118] sm:$0xff]
    %v71 = vld [vmem:[%s2 + $0x120] sm:$0xff]
    %v72 = vld [vmem:[%s2 + $0x128] sm:$0xff]
    %v73 = vld [vmem:[%s2 + $0x130] sm:$0xff]
    %v74 = vld [vmem:[%s2 + $0x138] sm:$0xff]
    %v75 = vld [vmem:[%s2 + $0x140] sm:$0xff]
    %v76 = vld [vmem:[%s2 + $0x148] sm:$0xff]
    %v77 = vld [vmem:[%s2 + $0x150] sm:$0xff]
    %v78 = vld [vmem:[%s2 + $0x158] sm:$0xff]
    %v79 = vld [vmem:[%s2 + $0x160] sm:$0xff]
    %v80 = vld [vmem:[%s2 + $0x168] sm:$0xff]
    %v81 = vld [vmem:[%s2 + $0x170] sm:$0xff]
    %v82 = vld [vmem:[%s2 + $0x178] sm:$0xff]
    %v83 = vld [vmem:[%s2 + $0x180] sm:$0xff]
    %v84 = vld [vmem:[%s2 + $0x188] sm:$0xff]
    %v85 = vld [vmem:[%s2 + $0x190] sm:$0xff]
    %v86 = vld [vmem:[%s2 + $0x198] sm:$0xff]
    %v87 = vld [vmem:[%s2 + $0x1a0] sm:$0xff]
    %v88 = vld [vmem:[%s2 + $0x1a8] sm:$0xff]
    %v89 = vld [vmem:[%s2 + $0x1b0] sm:$0xff]
    %v90 = vld [vmem:[%s2 + $0x1b8] sm:$0xff]
    %v91 = vld [vmem:[%s2 + $0x1c0] sm:$0xff]
    %v92 = vld [vmem:[%s2 + $0x1c8] sm:$0xff]
    %v93 = vld [vmem:[%s2 + $0x1d0] sm:$0xff]
    %v94 = vld [vmem:[%s2 + $0x1d8] sm:$0xff]
    %v95 = vld [vmem:[%s2 + $0x1e0] sm:$0xff]
    %v96 = vld [vmem:[%s2 + $0x1e8] sm:$0xff]
    %v97 = vld [vmem:[%s2 + $0x1f0] sm:$0xff]
    %v98 = vld [vmem:[%s2 + $0x1f8] sm:$0xff]
    %vm99 = vcmask 261120
    %v101 = vsel %vm99, %v15, 0
    %103 = vmatprep.subr.mxu0 0.0
    %104 = vmatpush1.msra.mxu0 0.0
    %105 = vmatprep.subr.mxu0 0.0
    %106 = vmatpush1.msra.mxu0 0.0
    %107 = vmatprep.subr.mxu0 0.0
    %108 = vmatpush1.msra.mxu0 0.0
    %109 = vmatprep.subr.mxu0 0.0
    %110 = vmatpush1.msra.mxu0 0.0
    %111 = vmatprep.subr.mxu0 0.0
    %112 = vmatpush1.msra.mxu0 0.0
    %113 = vmatprep.subr.mxu0 0.0
    %114 = vmatpush1.msra.mxu0 0.0
    %115 = vmatprep.subr.mxu0 0.0
    %116 = vmatpush1.msra.mxu0 0.0
    %117 = vmatprep.subr.mxu0 0.0
    %118 = vmatpush1.msra.mxu0 0.0
    %119 = vmatprep.subr.mxu0 0.0
    %120 = vmatpush1.msra.mxu0 0.0
    %121 = vmatprep.subr.mxu0 0.0
    %122 = vmatpush1.msra.mxu0 0.0
    %123 = vmatprep.subr.mxu0 0.0
    %124 = vmatpush1.msra.mxu0 0.0
    %125 = vmatprep.subr.mxu0 0.0
    %126 = vmatpush1.msra.mxu0 0.0
    %127 = vmatprep.subr.mxu0 0.0
    %128 = vmatpush1.msra.mxu0 %v22
    %129 = vmatprep.subr.mxu0 0.0
    %130 = vmatpush1.msra.mxu0 %v21
    %131 = vmatprep.subr.mxu0 0.0
    %132 = vmatpush1.msra.mxu0 %v20
    %133 = vmatprep.subr.mxu0 0.0
    %134 = vmatpush1.msra.mxu0 %v19
    %135 = vmatprep.subr.mxu0 0.0
    %136 = vmatpush2.msra.mxu0 0.0
    %137 = vmatprep.subr.mxu0 0.0
    %138 = vmatpush2.msra.mxu0 0.0
    %139 = vmatprep.subr.mxu0 0.0
    %140 = vmatpush2.msra.mxu0 0.0
    %141 = vmatprep.subr.mxu0 0.0
    %142 = vmatpush2.msra.mxu0 0.0
    %143 = vmatprep.subr.mxu0 0.0
    %144 = vmatpush2.msra.mxu0 0.0
    %145 = vmatprep.subr.mxu0 0.0
    %146 = vmatpush2.msra.mxu0 0.0
    %147 = vmatprep.subr.mxu0 0.0
    %148 = vmatpush2.msra.mxu0 0.0
    %149 = vmatprep.subr.mxu0 0.0
    %150 = vmatpush2.msra.mxu0 0.0
    %151 = vmatprep.subr.mxu0 0.0
    %152 = vmatpush2.msra.mxu0 0.0
    %153 = vmatprep.subr.mxu0 0.0
    %154 = vmatpush2.msra.mxu0 0.0
    %155 = vmatprep.subr.mxu0 0.0
    %156 = vmatpush2.msra.mxu0 0.0
    %157 = vmatprep.subr.mxu0 0.0
    %158 = vmatpush2.msra.mxu0 0.0
    %159 = vmatprep.subr.mxu0 0.0
    %160 = vmatpush2.msra.mxu0 0.0
    %161 = vmatprep.subr.mxu0 0.0
    %162 = vmatpush2.msra.mxu0 0.0
    %163 = vmatprep.subr.mxu0 0.0
    %164 = vmatpush2.msra.mxu0 0.0
    %165 = vmatprep.subr.mxu0 0.0
    %166 = vmatpush2.msra.mxu0 0.0
    %167 = vmatprep.mubr.f32.mxu0 0.0
    %168 = vmatmul.mubr.f32.gmra.mxu0 %v101
    %v169 = vpop.f32.mrf.mxu0
    %v170 = vadd.f32 0.0, %v169
    %v171 = vpop.f32.mrf.mxu0
    %172 = vdwg.mxu0
    %v174 = vsel %vm99, %v16, 0
    %176 = vmatprep.subr.mxu0 0.0
    %177 = vmatpush1.msra.mxu0 0.0
    %178 = vmatprep.subr.mxu0 0.0
    %179 = vmatpush1.msra.mxu0 0.0
    %180 = vmatprep.subr.mxu0 0.0
    %181 = vmatpush1.msra.mxu0 0.0
    %182 = vmatprep.subr.mxu0 0.0
    %183 = vmatpush1.msra.mxu0 0.0
    %184 = vmatprep.subr.mxu0 0.0
    %185 = vmatpush1.msra.mxu0 0.0
    %186 = vmatprep.subr.mxu0 0.0
    %187 = vmatpush1.msra.mxu0 0.0
    %188 = vmatprep.subr.mxu0 0.0
    %189 = vmatpush1.msra.mxu0 0.0
    %190 = vmatprep.subr.mxu0 0.0
    %191 = vmatpush1.msra.mxu0 0.0
    %192 = vmatprep.subr.mxu0 0.0
    %193 = vmatpush1.msra.mxu0 0.0
    %194 = vmatprep.subr.mxu0 0.0
    %195 = vmatpush1.msra.mxu0 0.0
    %196 = vmatprep.subr.mxu0 0.0
    %197 = vmatpush1.msra.mxu0 0.0
    %198 = vmatprep.subr.mxu0 0.0
    %199 = vmatpush1.msra.mxu0 0.0
    %200 = vmatprep.subr.mxu0 0.0
    %201 = vmatpush1.msra.mxu0 %v26
    %202 = vmatprep.subr.mxu0 0.0
    %203 = vmatpush1.msra.mxu0 %v25
    %204 = vmatprep.subr.mxu0 0.0
    %205 = vmatpush1.msra.mxu0 %v24
    %206 = vmatprep.subr.mxu0 0.0
    %207 = vmatpush1.msra.mxu0 %v23
    %208 = vmatprep.subr.mxu0 0.0
    %209 = vmatpush2.msra.mxu0 0.0
    %210 = vmatprep.subr.mxu0 0.0
    %211 = vmatpush2.msra.mxu0 0.0
    %212 = vmatprep.subr.mxu0 0.0
    %213 = vmatpush2.msra.mxu0 0.0
    %214 = vmatprep.subr.mxu0 0.0
    %215 = vmatpush2.msra.mxu0 0.0
    %216 = vmatprep.subr.mxu0 0.0
    %217 = vmatpush2.msra.mxu0 0.0
    %218 = vmatprep.subr.mxu0 0.0
    %219 = vmatpush2.msra.mxu0 0.0
    %220 = vmatprep.subr.mxu0 0.0
    %221 = vmatpush2.msra.mxu0 0.0
    %222 = vmatprep.subr.mxu0 0.0
    %223 = vmatpush2.msra.mxu0 0.0
    %224 = vmatprep.subr.mxu0 0.0
    %225 = vmatpush2.msra.mxu0 0.0
    %226 = vmatprep.subr.mxu0 0.0
    %227 = vmatpush2.msra.mxu0 0.0
    %228 = vmatprep.subr.mxu0 0.0
    %229 = vmatpush2.msra.mxu0 0.0
    %230 = vmatprep.subr.mxu0 0.0
    %231 = vmatpush2.msra.mxu0 0.0
    %232 = vmatprep.subr.mxu0 0.0
    %233 = vmatpush2.msra.mxu0 0.0
    %234 = vmatprep.subr.mxu0 0.0
    %235 = vmatpush2.msra.mxu0 0.0
    %236 = vmatprep.subr.mxu0 0.0
    %237 = vmatpush2.msra.mxu0 0.0
    %238 = vmatprep.subr.mxu0 0.0
    %239 = vmatpush2.msra.mxu0 0.0
    %240 = vmatprep.mubr.f32.mxu0 0.0
    %241 = vmatmul.mubr.f32.gmra.mxu0 %v174
    %v242 = vpop.f32.mrf.mxu0
    %v243 = vadd.f32 0.0, %v242
    %v244 = vpop.f32.mrf.mxu0
    %245 = vdwg.mxu0
    %v247 = vsel %vm99, %v17, 0
    %249 = vmatprep.subr.mxu0 0.0
    %250 = vmatpush1.msra.mxu0 0.0
    %251 = vmatprep.subr.mxu0 0.0
    %252 = vmatpush1.msra.mxu0 0.0
    %253 = vmatprep.subr.mxu0 0.0
    %254 = vmatpush1.msra.mxu0 0.0
    %255 = vmatprep.subr.mxu0 0.0
    %256 = vmatpush1.msra.mxu0 0.0
    %257 = vmatprep.subr.mxu0 0.0
    %258 = vmatpush1.msra.mxu0 0.0
    %259 = vmatprep.subr.mxu0 0.0
    %260 = vmatpush1.msra.mxu0 0.0
    %261 = vmatprep.subr.mxu0 0.0
    %262 = vmatpush1.msra.mxu0 0.0
    %263 = vmatprep.subr.mxu0 0.0
    %264 = vmatpush1.msra.mxu0 0.0
    %265 = vmatprep.subr.mxu0 0.0
    %266 = vmatpush1.msra.mxu0 0.0
    %267 = vmatprep.subr.mxu0 0.0
    %268 = vmatpush1.msra.mxu0 0.0
    %269 = vmatprep.subr.mxu0 0.0
    %270 = vmatpush1.msra.mxu0 0.0
    %271 = vmatprep.subr.mxu0 0.0
    %272 = vmatpush1.msra.mxu0 0.0
    %273 = vmatprep.subr.mxu0 0.0
    %274 = vmatpush1.msra.mxu0 %v30
    %275 = vmatprep.subr.mxu0 0.0
    %276 = vmatpush1.msra.mxu0 %v29
    %277 = vmatprep.subr.mxu0 0.0
    %278 = vmatpush1.msra.mxu0 %v28
    %279 = vmatprep.subr.mxu0 0.0
    %280 = vmatpush1.msra.mxu0 %v27
    %281 = vmatprep.subr.mxu0 0.0
    %282 = vmatpush2.msra.mxu0 0.0
    %283 = vmatprep.subr.mxu0 0.0
    %284 = vmatpush2.msra.mxu0 0.0
    %285 = vmatprep.subr.mxu0 0.0
    %286 = vmatpush2.msra.mxu0 0.0
    %287 = vmatprep.subr.mxu0 0.0
    %288 = vmatpush2.msra.mxu0 0.0
    %289 = vmatprep.subr.mxu0 0.0
    %290 = vmatpush2.msra.mxu0 0.0
    %291 = vmatprep.subr.mxu0 0.0
    %292 = vmatpush2.msra.mxu0 0.0
    %293 = vmatprep.subr.mxu0 0.0
    %294 = vmatpush2.msra.mxu0 0.0
    %295 = vmatprep.subr.mxu0 0.0
    %296 = vmatpush2.msra.mxu0 0.0
    %297 = vmatprep.subr.mxu0 0.0
    %298 = vmatpush2.msra.mxu0 0.0
    %299 = vmatprep.subr.mxu0 0.0
    %300 = vmatpush2.msra.mxu0 0.0
    %301 = vmatprep.subr.mxu0 0.0
    %302 = vmatpush2.msra.mxu0 0.0
    %303 = vmatprep.subr.mxu0 0.0
    %304 = vmatpush2.msra.mxu0 0.0
    %305 = vmatprep.subr.mxu0 0.0
    %306 = vmatpush2.msra.mxu0 0.0
    %307 = vmatprep.subr.mxu0 0.0
    %308 = vmatpush2.msra.mxu0 0.0
    %309 = vmatprep.subr.mxu0 0.0
    %310 = vmatpush2.msra.mxu0 0.0
    %311 = vmatprep.subr.mxu0 0.0
    %312 = vmatpush2.msra.mxu0 0.0
    %313 = vmatprep.mubr.f32.mxu0 0.0
    %314 = vmatmul.mubr.f32.gmra.mxu0 %v247
    %v315 = vpop.f32.mrf.mxu0
    %v316 = vadd.f32 0.0, %v315
    %v317 = vpop.f32.mrf.mxu0
    %318 = vdwg.mxu0
    %v320 = vsel %vm99, %v18, 0
    %322 = vmatprep.subr.mxu0 0.0
    %323 = vmatpush1.msra.mxu0 0.0
    %324 = vmatprep.subr.mxu0 0.0
    %325 = vmatpush1.msra.mxu0 0.0
    %326 = vmatprep.subr.mxu0 0.0
    %327 = vmatpush1.msra.mxu0 0.0
    %328 = vmatprep.subr.mxu0 0.0
    %329 = vmatpush1.msra.mxu0 0.0
    %330 = vmatprep.subr.mxu0 0.0
    %331 = vmatpush1.msra.mxu0 0.0
    %332 = vmatprep.subr.mxu0 0.0
    %333 = vmatpush1.msra.mxu0 0.0
    %334 = vmatprep.subr.mxu0 0.0
    %335 = vmatpush1.msra.mxu0 0.0
    %336 = vmatprep.subr.mxu0 0.0
    %337 = vmatpush1.msra.mxu0 0.0
    %338 = vmatprep.subr.mxu0 0.0
    %339 = vmatpush1.msra.mxu0 0.0
    %340 = vmatprep.subr.mxu0 0.0
    %341 = vmatpush1.msra.mxu0 0.0
    %342 = vmatprep.subr.mxu0 0.0
    %343 = vmatpush1.msra.mxu0 0.0
    %344 = vmatprep.subr.mxu0 0.0
    %345 = vmatpush1.msra.mxu0 0.0
    %346 = vmatprep.subr.mxu0 0.0
    %347 = vmatpush1.msra.mxu0 %v34
    %348 = vmatprep.subr.mxu0 0.0
    %349 = vmatpush1.msra.mxu0 %v33
    %350 = vmatprep.subr.mxu0 0.0
    %351 = vmatpush1.msra.mxu0 %v32
    %352 = vmatprep.subr.mxu0 0.0
    %353 = vmatpush1.msra.mxu0 %v31
    %354 = vmatprep.subr.mxu0 0.0
    %355 = vmatpush2.msra.mxu0 0.0
    %356 = vmatprep.subr.mxu0 0.0
    %357 = vmatpush2.msra.mxu0 0.0
    %358 = vmatprep.subr.mxu0 0.0
    %359 = vmatpush2.msra.mxu0 0.0
    %360 = vmatprep.subr.mxu0 0.0
    %361 = vmatpush2.msra.mxu0 0.0
    %362 = vmatprep.subr.mxu0 0.0
    %363 = vmatpush2.msra.mxu0 0.0
    %364 = vmatprep.subr.mxu0 0.0
    %365 = vmatpush2.msra.mxu0 0.0
    %366 = vmatprep.subr.mxu0 0.0
    %367 = vmatpush2.msra.mxu0 0.0
    %368 = vmatprep.subr.mxu0 0.0
    %369 = vmatpush2.msra.mxu0 0.0
    %370 = vmatprep.subr.mxu0 0.0
    %371 = vmatpush2.msra.mxu0 0.0
    %372 = vmatprep.subr.mxu0 0.0
    %373 = vmatpush2.msra.mxu0 0.0
    %374 = vmatprep.subr.mxu0 0.0
    %375 = vmatpush2.msra.mxu0 0.0
    %376 = vmatprep.subr.mxu0 0.0
    %377 = vmatpush2.msra.mxu0 0.0
    %378 = vmatprep.subr.mxu0 0.0
    %379 = vmatpush2.msra.mxu0 0.0
    %380 = vmatprep.subr.mxu0 0.0
    %381 = vmatpush2.msra.mxu0 0.0
    %382 = vmatprep.subr.mxu0 0.0
    %383 = vmatpush2.msra.mxu0 0.0
    %384 = vmatprep.subr.mxu0 0.0
    %385 = vmatpush2.msra.mxu0 0.0
    %386 = vmatprep.mubr.f32.mxu0 0.0
    %387 = vmatmul.mubr.f32.gmra.mxu0 %v320
    %v388 = vpop.f32.mrf.mxu0
    %v389 = vadd.f32 0.0, %v388
    %v390 = vpop.f32.mrf.mxu0
    %391 = vdwg.mxu0
    %v392 = vmul.f32 %v170, 0.5
    %v393 = vmul.f32 %v243, 0.5
    %v394 = vmul.f32 %v316, 0.5
    %v395 = vmul.f32 %v389, 0.5
    %v396 = vmul.f32 %v170, 0.70710677
    %v397 = vmul.f32 %v243, 0.70710677
    %v398 = vmul.f32 %v316, 0.70710677
    %v399 = vmul.f32 %v389, 0.70710677
    %v400 = verf.f32.pop %v396
    %v401 = verf.f32.pop %v397
    %v402 = verf.f32.pop %v398
    %v403 = verf.f32.pop %v399
    %v404 = vadd.f32 %v400, 1.0
    %v405 = vadd.f32 %v401, 1.0
    %v406 = vadd.f32 %v402, 1.0
    %v407 = vadd.f32 %v403, 1.0
    %v408 = vmul.f32 %v392, %v404
    %v409 = vmul.f32 %v393, %v405
    %v410 = vmul.f32 %v394, %v406
    %v411 = vmul.f32 %v395, %v407
    %412 = vmatprep.subr.mxu0 0.0
    %413 = vmatpush1.msra.mxu0 %v50
    %414 = vmatprep.subr.mxu0 0.0
    %415 = vmatpush1.msra.mxu0 %v49
    %416 = vmatprep.subr.mxu0 0.0
    %417 = vmatpush1.msra.mxu0 %v48
    %418 = vmatprep.subr.mxu0 0.0
    %419 = vmatpush1.msra.mxu0 %v47
    %420 = vmatprep.subr.mxu0 0.0
    %421 = vmatpush1.msra.mxu0 %v46
    %422 = vmatprep.subr.mxu0 0.0
    %423 = vmatpush1.msra.mxu0 %v45
    %424 = vmatprep.subr.mxu0 0.0
    %425 = vmatpush1.msra.mxu0 %v44
    %426 = vmatprep.subr.mxu0 0.0
    %427 = vmatpush1.msra.mxu0 %v43
    %428 = vmatprep.subr.mxu0 0.0
    %429 = vmatpush1.msra.mxu0 %v42
    %430 = vmatprep.subr.mxu0 0.0
    %431 = vmatpush1.msra.mxu0 %v41
    %432 = vmatprep.subr.mxu0 0.0
    %433 = vmatpush1.msra.mxu0 %v40
    %434 = vmatprep.subr.mxu0 0.0
    %435 = vmatpush1.msra.mxu0 %v39
    %436 = vmatprep.subr.mxu0 0.0
    %437 = vmatpush1.msra.mxu0 %v38
    %438 = vmatprep.subr.mxu0 0.0
    %439 = vmatpush1.msra.mxu0 %v37
    %440 = vmatprep.subr.mxu0 0.0
    %441 = vmatpush1.msra.mxu0 %v36
    %442 = vmatprep.subr.mxu0 0.0
    %443 = vmatpush1.msra.mxu0 %v35
    %444 = vmatprep.subr.mxu0 0.0
    %445 = vmatpush2.msra.mxu0 0.0
    %446 = vmatprep.subr.mxu0 0.0
    %447 = vmatpush2.msra.mxu0 0.0
    %448 = vmatprep.subr.mxu0 0.0
    %449 = vmatpush2.msra.mxu0 0.0
    %450 = vmatprep.subr.mxu0 0.0
    %451 = vmatpush2.msra.mxu0 0.0
    %452 = vmatprep.subr.mxu0 0.0
    %453 = vmatpush2.msra.mxu0 0.0
    %454 = vmatprep.subr.mxu0 0.0
    %455 = vmatpush2.msra.mxu0 0.0
    %456 = vmatprep.subr.mxu0 0.0
    %457 = vmatpush2.msra.mxu0 0.0
    %458 = vmatprep.subr.mxu0 0.0
    %459 = vmatpush2.msra.mxu0 0.0
    %460 = vmatprep.subr.mxu0 0.0
    %461 = vmatpush2.msra.mxu0 0.0
    %462 = vmatprep.subr.mxu0 0.0
    %463 = vmatpush2.msra.mxu0 0.0
    %464 = vmatprep.subr.mxu0 0.0
    %465 = vmatpush2.msra.mxu0 0.0
    %466 = vmatprep.subr.mxu0 0.0
    %467 = vmatpush2.msra.mxu0 0.0
    %468 = vmatprep.subr.mxu0 0.0
    %469 = vmatpush2.msra.mxu0 0.0
    %470 = vmatprep.subr.mxu0 0.0
    %471 = vmatpush2.msra.mxu0 0.0
    %472 = vmatprep.subr.mxu0 0.0
    %473 = vmatpush2.msra.mxu0 0.0
    %474 = vmatprep.subr.mxu0 0.0
    %475 = vmatpush2.msra.mxu0 0.0
    %476 = vmatprep.mubr.f32.mxu0 0.0
    %477 = vmatmul.mubr.f32.gmra.mxu0 %v408
    %v478 = vpop.f32.mrf.mxu0
    %v479 = vadd.f32 0.0, %v478
    %v480 = vpop.f32.mrf.mxu0
    %481 = vdwg.mxu0
    %482 = vmatprep.subr.mxu0 0.0
    %483 = vmatpush1.msra.mxu0 %v66
    %484 = vmatprep.subr.mxu0 0.0
    %485 = vmatpush1.msra.mxu0 %v65
    %486 = vmatprep.subr.mxu0 0.0
    %487 = vmatpush1.msra.mxu0 %v64
    %488 = vmatprep.subr.mxu0 0.0
    %489 = vmatpush1.msra.mxu0 %v63
    %490 = vmatprep.subr.mxu0 0.0
    %491 = vmatpush1.msra.mxu0 %v62
    %492 = vmatprep.subr.mxu0 0.0
    %493 = vmatpush1.msra.mxu0 %v61
    %494 = vmatprep.subr.mxu0 0.0
    %495 = vmatpush1.msra.mxu0 %v60
    %496 = vmatprep.subr.mxu0 0.0
    %497 = vmatpush1.msra.mxu0 %v59
    %498 = vmatprep.subr.mxu0 0.0
    %499 = vmatpush1.msra.mxu0 %v58
    %500 = vmatprep.subr.mxu0 0.0
    %501 = vmatpush1.msra.mxu0 %v57
    %502 = vmatprep.subr.mxu0 0.0
    %503 = vmatpush1.msra.mxu0 %v56
    %504 = vmatprep.subr.mxu0 0.0
    %505 = vmatpush1.msra.mxu0 %v55
    %506 = vmatprep.subr.mxu0 0.0
    %507 = vmatpush1.msra.mxu0 %v54
    %508 = vmatprep.subr.mxu0 0.0
    %509 = vmatpush1.msra.mxu0 %v53
    %510 = vmatprep.subr.mxu0 0.0
    %511 = vmatpush1.msra.mxu0 %v52
    %512 = vmatprep.subr.mxu0 0.0
    %513 = vmatpush1.msra.mxu0 %v51
    %514 = vmatprep.subr.mxu0 0.0
    %515 = vmatpush2.msra.mxu0 0.0
    %516 = vmatprep.subr.mxu0 0.0
    %517 = vmatpush2.msra.mxu0 0.0
    %518 = vmatprep.subr.mxu0 0.0
    %519 = vmatpush2.msra.mxu0 0.0
    %520 = vmatprep.subr.mxu0 0.0
    %521 = vmatpush2.msra.mxu0 0.0
    %522 = vmatprep.subr.mxu0 0.0
    %523 = vmatpush2.msra.mxu0 0.0
    %524 = vmatprep.subr.mxu0 0.0
    %525 = vmatpush2.msra.mxu0 0.0
    %526 = vmatprep.subr.mxu0 0.0
    %527 = vmatpush2.msra.mxu0 0.0
    %528 = vmatprep.subr.mxu0 0.0
    %529 = vmatpush2.msra.mxu0 0.0
    %530 = vmatprep.subr.mxu0 0.0
    %531 = vmatpush2.msra.mxu0 0.0
    %532 = vmatprep.subr.mxu0 0.0
    %533 = vmatpush2.msra.mxu0 0.0
    %534 = vmatprep.subr.mxu0 0.0
    %535 = vmatpush2.msra.mxu0 0.0
    %536 = vmatprep.subr.mxu0 0.0
    %537 = vmatpush2.msra.mxu0 0.0
    %538 = vmatprep.subr.mxu0 0.0
    %539 = vmatpush2.msra.mxu0 0.0
    %540 = vmatprep.subr.mxu0 0.0
    %541 = vmatpush2.msra.mxu0 0.0
    %542 = vmatprep.subr.mxu0 0.0
    %543 = vmatpush2.msra.mxu0 0.0
    %544 = vmatprep.subr.mxu0 0.0
    %545 = vmatpush2.msra.mxu0 0.0
    %546 = vmatprep.mubr.f32.mxu0 0.0
    %547 = vmatmul.mubr.f32.gmra.mxu0 %v409
    %v548 = vpop.f32.mrf.mxu0
    %v549 = vadd.f32 0.0, %v548
    %v550 = vpop.f32.mrf.mxu0
    %551 = vdwg.mxu0
    %552 = vmatprep.subr.mxu0 0.0
    %553 = vmatpush1.msra.mxu0 %v82
    %554 = vmatprep.subr.mxu0 0.0
    %555 = vmatpush1.msra.mxu0 %v81
    %556 = vmatprep.subr.mxu0 0.0
    %557 = vmatpush1.msra.mxu0 %v80
    %558 = vmatprep.subr.mxu0 0.0
    %559 = vmatpush1.msra.mxu0 %v79
    %560 = vmatprep.subr.mxu0 0.0
    %561 = vmatpush1.msra.mxu0 %v78
    %562 = vmatprep.subr.mxu0 0.0
    %563 = vmatpush1.msra.mxu0 %v77
    %564 = vmatprep.subr.mxu0 0.0
    %565 = vmatpush1.msra.mxu0 %v76
    %566 = vmatprep.subr.mxu0 0.0
    %567 = vmatpush1.msra.mxu0 %v75
    %568 = vmatprep.subr.mxu0 0.0
    %569 = vmatpush1.msra.mxu0 %v74
    %570 = vmatprep.subr.mxu0 0.0
    %571 = vmatpush1.msra.mxu0 %v73
    %572 = vmatprep.subr.mxu0 0.0
    %573 = vmatpush1.msra.mxu0 %v72
    %574 = vmatprep.subr.mxu0 0.0
    %575 = vmatpush1.msra.mxu0 %v71
    %576 = vmatprep.subr.mxu0 0.0
    %577 = vmatpush1.msra.mxu0 %v70
    %578 = vmatprep.subr.mxu0 0.0
    %579 = vmatpush1.msra.mxu0 %v69
    %580 = vmatprep.subr.mxu0 0.0
    %581 = vmatpush1.msra.mxu0 %v68
    %582 = vmatprep.subr.mxu0 0.0
    %583 = vmatpush1.msra.mxu0 %v67
    %584 = vmatprep.subr.mxu0 0.0
    %585 = vmatpush2.msra.mxu0 0.0
    %586 = vmatprep.subr.mxu0 0.0
    %587 = vmatpush2.msra.mxu0 0.0
    %588 = vmatprep.subr.mxu0 0.0
    %589 = vmatpush2.msra.mxu0 0.0
    %590 = vmatprep.subr.mxu0 0.0
    %591 = vmatpush2.msra.mxu0 0.0
    %592 = vmatprep.subr.mxu0 0.0
    %593 = vmatpush2.msra.mxu0 0.0
    %594 = vmatprep.subr.mxu0 0.0
    %595 = vmatpush2.msra.mxu0 0.0
    %596 = vmatprep.subr.mxu0 0.0
    %597 = vmatpush2.msra.mxu0 0.0
    %598 = vmatprep.subr.mxu0 0.0
    %599 = vmatpush2.msra.mxu0 0.0
    %600 = vmatprep.subr.mxu0 0.0
    %601 = vmatpush2.msra.mxu0 0.0
    %602 = vmatprep.subr.mxu0 0.0
    %603 = vmatpush2.msra.mxu0 0.0
    %604 = vmatprep.subr.mxu0 0.0
    %605 = vmatpush2.msra.mxu0 0.0
    %606 = vmatprep.subr.mxu0 0.0
    %607 = vmatpush2.msra.mxu0 0.0
    %608 = vmatprep.subr.mxu0 0.0
    %609 = vmatpush2.msra.mxu0 0.0
    %610 = vmatprep.subr.mxu0 0.0
    %611 = vmatpush2.msra.mxu0 0.0
    %612 = vmatprep.subr.mxu0 0.0
    %613 = vmatpush2.msra.mxu0 0.0
    %614 = vmatprep.subr.mxu0 0.0
    %615 = vmatpush2.msra.mxu0 0.0
    %616 = vmatprep.mubr.f32.mxu0 0.0
    %617 = vmatmul.mubr.f32.gmra.mxu0 %v410
    %v618 = vpop.f32.mrf.mxu0
    %v619 = vadd.f32 0.0, %v618
    %v620 = vpop.f32.mrf.mxu0
    %621 = vdwg.mxu0
    %622 = vmatprep.subr.mxu0 0.0
    %623 = vmatpush1.msra.mxu0 %v98
    %624 = vmatprep.subr.mxu0 0.0
    %625 = vmatpush1.msra.mxu0 %v97
    %626 = vmatprep.subr.mxu0 0.0
    %627 = vmatpush1.msra.mxu0 %v96
    %628 = vmatprep.subr.mxu0 0.0
    %629 = vmatpush1.msra.mxu0 %v95
    %630 = vmatprep.subr.mxu0 0.0
    %631 = vmatpush1.msra.mxu0 %v94
    %632 = vmatprep.subr.mxu0 0.0
    %633 = vmatpush1.msra.mxu0 %v93
    %634 = vmatprep.subr.mxu0 0.0
    %635 = vmatpush1.msra.mxu0 %v92
    %636 = vmatprep.subr.mxu0 0.0
    %637 = vmatpush1.msra.mxu0 %v91
    %638 = vmatprep.subr.mxu0 0.0
    %639 = vmatpush1.msra.mxu0 %v90
    %640 = vmatprep.subr.mxu0 0.0
    %641 = vmatpush1.msra.mxu0 %v89
    %642 = vmatprep.subr.mxu0 0.0
    %643 = vmatpush1.msra.mxu0 %v88
    %644 = vmatprep.subr.mxu0 0.0
    %645 = vmatpush1.msra.mxu0 %v87
    %646 = vmatprep.subr.mxu0 0.0
    %647 = vmatpush1.msra.mxu0 %v86
    %648 = vmatprep.subr.mxu0 0.0
    %649 = vmatpush1.msra.mxu0 %v85
    %650 = vmatprep.subr.mxu0 0.0
    %651 = vmatpush1.msra.mxu0 %v84
    %652 = vmatprep.subr.mxu0 0.0
    %653 = vmatpush1.msra.mxu0 %v83
    %654 = vmatprep.subr.mxu0 0.0
    %655 = vmatpush2.msra.mxu0 0.0
    %656 = vmatprep.subr.mxu0 0.0
    %657 = vmatpush2.msra.mxu0 0.0
    %658 = vmatprep.subr.mxu0 0.0
    %659 = vmatpush2.msra.mxu0 0.0
    %660 = vmatprep.subr.mxu0 0.0
    %661 = vmatpush2.msra.mxu0 0.0
    %662 = vmatprep.subr.mxu0 0.0
    %663 = vmatpush2.msra.mxu0 0.0
    %664 = vmatprep.subr.mxu0 0.0
    %665 = vmatpush2.msra.mxu0 0.0
    %666 = vmatprep.subr.mxu0 0.0
    %667 = vmatpush2.msra.mxu0 0.0
    %668 = vmatprep.subr.mxu0 0.0
    %669 = vmatpush2.msra.mxu0 0.0
    %670 = vmatprep.subr.mxu0 0.0
    %671 = vmatpush2.msra.mxu0 0.0
    %672 = vmatprep.subr.mxu0 0.0
    %673 = vmatpush2.msra.mxu0 0.0
    %674 = vmatprep.subr.mxu0 0.0
    %675 = vmatpush2.msra.mxu0 0.0
    %676 = vmatprep.subr.mxu0 0.0
    %677 = vmatpush2.msra.mxu0 0.0
    %678 = vmatprep.subr.mxu0 0.0
    %679 = vmatpush2.msra.mxu0 0.0
    %680 = vmatprep.subr.mxu0 0.0
    %681 = vmatpush2.msra.mxu0 0.0
    %682 = vmatprep.subr.mxu0 0.0
    %683 = vmatpush2.msra.mxu0 0.0
    %684 = vmatprep.subr.mxu0 0.0
    %685 = vmatpush2.msra.mxu0 0.0
    %686 = vmatprep.mubr.f32.mxu0 0.0
    %687 = vmatmul.mubr.f32.gmra.mxu0 %v411
    %v688 = vpop.f32.mrf.mxu0
    %v689 = vadd.f32 0.0, %v688
    %v690 = vpop.f32.mrf.mxu0
    %691 = vdwg.mxu0
    %692 = vst.msk [vmem:[#allocation2] sm:$0xff] %vm99, %v479
    %693 = vst.msk [vmem:[#allocation2 + $0x8] sm:$0xff] %vm99, %v549
    %694 = vst.msk [vmem:[#allocation2 + $0x10] sm:$0xff] %vm99, %v619
    %695 = vst.msk [vmem:[#allocation2 + $0x18] sm:$0xff] %vm99, %v689
    // Predicated region
    $region14: #{tpu_custom_call.1} parent=1 // pred_check
      _
    $region15: #{tpu_custom_call.1} parent=1 // pred_check_branch
      %697 = sbr.rel (0) target = $region17
    $region16: #{tpu_custom_call.1} parent=1 // pred_region
      %s699 = ssub.s32 512, 512
      %700 = vsyncadd [#allocation3], %s699
      %s701 = sshll.u32 [#allocation2], 4
      %s702 = int_to_ptr.vmem [resolvable:$true] %s701
      %707 = dma.vmem_to_hbm [thread:$0]  %s702, 512, %s3, [#allocation3], 128, 128, 8
    $region17: #{tpu_custom_call.1} parent=1 // pred_fallthru
      _
    // Predicated region
    $region18: #{tpu_custom_call.1} parent=1 // pred_check
      _
    $region19: #{tpu_custom_call.1} parent=1 // pred_check_branch
      %709 = sbr.rel (0) target = $region21
    $region20: #{tpu_custom_call.1} parent=1 // pred_region
      %710 = dma.done [#allocation3], 512
    $region21: #{tpu_custom_call.1} parent=1 // pred_fallthru
      _
    %711 = vsyncpa [#allocation3], 1

</llo_original>
